<compile_context>
chip_gen: v5e
topology: v5e:2x2
jax: 0.10.0
libtpu: 0.0.40
codegen_flags: <defaults>
</compile_context>

<pallas_src>
import functools

import jax
import jax.numpy as jnp
from jax.experimental import pallas as pl
from jax.experimental.pallas import tpu as pltpu


def _dice_ce_kernel(x_ref, y_ref, tp_ref, ps_ref, cnt_ref, ce_ref,
                    *, hw, tile, tiles_per_shard):
    s = pl.program_id(0)          # shard (parallel, per-core accumulators)
    bn = pl.program_id(1)         # batch element
    j = pl.program_id(2)          # pixel tile within shard

    @pl.when(jnp.logical_and(bn == 0, j == 0))
    def _init():
        tp_ref[...] = jnp.zeros_like(tp_ref)
        ps_ref[...] = jnp.zeros_like(ps_ref)
        cnt_ref[...] = jnp.zeros_like(cnt_ref)
        ce_ref[...] = jnp.zeros_like(ce_ref)

    x = x_ref[...].astype(jnp.float32)   # (1, C, T): channels on sublanes
    labels = y_ref[...]                  # (1, 1, T) int32
    _, c, t = x.shape

    # Lane validity mask: covers the ragged last tile and the clamped
    # duplicate tile a shard may see when tiles don't split evenly.
    pix0 = (s * tiles_per_shard + j) * tile
    lane = jax.lax.broadcasted_iota(jnp.int32, (1, 1, t), 2)
    valid = (pix0 + lane) < hw                       # (1, 1, T) bool
    maskf = valid.astype(jnp.float32)

    x = jnp.where(valid, x, 0.0)                     # kill garbage/pad logits

    cls = jax.lax.broadcasted_iota(jnp.int32, (1, c, t), 1)
    onehot = jnp.logical_and(cls == labels, valid).astype(jnp.float32)

    # Softmax over the channel (sublane) axis.
    m = jnp.max(x, axis=1, keepdims=True)            # (1, 1, T)
    e = jnp.exp(x - m)                               # (1, C, T)
    denom = jnp.sum(e, axis=1, keepdims=True)        # (1, 1, T)
    p = e * (1.0 / denom)                            # one divide per pixel

    pm = p * maskf                                   # masked probs
    # TODO(synk): for very large C the lane reductions below could be moved to
    # the MXU via a ones-vector matmul; unnecessary for small C.
    tp_ref[...] += jnp.sum(pm * onehot, axis=2, keepdims=True)   # (1, C, 1)
    ps_ref[...] += jnp.sum(pm, axis=2, keepdims=True)            # (1, C, 1)
    cnt_ref[...] += jnp.sum(onehot, axis=2, keepdims=True)       # (1, C, 1)

    # Cross entropy: -(x[label] - m - log(denom)); padded lanes contribute 0
    # because onehot is already masked and maskf zeroes the (m + log denom).
    x_lab = jnp.sum(x * onehot, axis=1, keepdims=True)           # (1, 1, T)
    ce = (m + jnp.log(denom)) * maskf - x_lab                    # (1, 1, T)
    ce_ref[...] += jnp.sum(ce, axis=2, keepdims=True)            # (1, 1, 1)


def dice_ce_loss(x_nchw, y_n1hw, *, max_tile=8192, num_shards=2):
    """DiceCELoss.forward: x (N,C,H,W) float logits, y (N,1,H,W) int labels."""
    n, c, h, w = x_nchw.shape
    hw = h * w
    p_total = n * hw

    # Channel-major, pixels-on-lanes layout; reshapes are free (no transpose,
    # no pad, no dtype upcast in HBM).
    x3 = x_nchw.reshape(n, c, hw)
    y3 = y_n1hw.reshape(n, 1, hw).astype(jnp.int32)

    # Pixel-tile size: ~512 KiB per x block, multiple of 128 lanes, capped so
    # it stays well inside scoped VMEM on every TPU generation (incl. v7x).
    itemsize = x_nchw.dtype.itemsize
    t = (512 * 1024) // max(1, c * itemsize)
    t = max(128, min(max_tile, (t // 128) * 128))
    tile = hw if hw <= t else t

    num_tiles = pl.cdiv(hw, tile)
    shards = min(num_shards, num_tiles)          # per-core partials on v7x
    tiles_per_shard = pl.cdiv(num_tiles, shards)

    def in_idx(s, bn, j):
        # Clamp so a shard's overhang tile never DMAs out of bounds; the
        # in-kernel mask zeroes its contribution.
        t_idx = jnp.minimum(s * tiles_per_shard + j, num_tiles - 1)
        return (bn, 0, t_idx)

    kernel = functools.partial(
        _dice_ce_kernel, hw=hw, tile=tile, tiles_per_shard=tiles_per_shard)

    tp, psum, cnt, ce = pl.pallas_call(
        kernel,
        out_shape=(
            jax.ShapeDtypeStruct((shards, c, 1), jnp.float32),
            jax.ShapeDtypeStruct((shards, c, 1), jnp.float32),
            jax.ShapeDtypeStruct((shards, c, 1), jnp.float32),
            jax.ShapeDtypeStruct((shards, 1, 1), jnp.float32),
        ),
        grid_spec=pltpu.PrefetchScalarGridSpec(
            num_scalar_prefetch=0,
            grid=(shards, n, tiles_per_shard),
            in_specs=[
                pl.BlockSpec((1, c, tile), in_idx),
                pl.BlockSpec((1, 1, tile), in_idx),
            ],
            out_specs=[
                pl.BlockSpec((1, c, 1), lambda s, bn, j: (s, 0, 0)),
                pl.BlockSpec((1, c, 1), lambda s, bn, j: (s, 0, 0)),
                pl.BlockSpec((1, c, 1), lambda s, bn, j: (s, 0, 0)),
                pl.BlockSpec((1, 1, 1), lambda s, bn, j: (s, 0, 0)),
            ],
        ),
        compiler_params=pltpu.CompilerParams(
            dimension_semantics=("parallel", "arbitrary", "arbitrary"),
            vmem_limit_bytes=32 * 1024 * 1024,
        ),
    )(x3, y3)

    # Tiny per-class finalization in plain JAX (sum per-shard partials).
    tp = jnp.sum(tp[:, :, 0], axis=0)        # (C,)
    psum = jnp.sum(psum[:, :, 0], axis=0)    # (C,)
    cnt = jnp.sum(cnt[:, :, 0], axis=0)      # (C,)
    ce_sum = jnp.sum(ce)

    fp = psum - tp
    fn = cnt - tp

    smooth = 1e-05
    numerator = 2.0 * tp + smooth
    denominator = 2.0 * tp + fp + fn + smooth
    dc = numerator / (denominator + 1e-08)
    dc_loss = -jnp.mean(dc[1:])              # ignore_bg=True -> skip class 0

    ce_loss = ce_sum / p_total               # CrossEntropyLoss mean
    return dc_loss + ce_loss


def _reference_loss(x_nchw, y_n1hw):
    """Pure-JAX reference reproducing the PyTorch module."""
    n, c, h, w = x_nchw.shape
    x = x_nchw.astype(jnp.float32)
    y = y_n1hw.astype(jnp.int32)

    y_onehot = jax.nn.one_hot(y[:, 0], c, dtype=jnp.float32)      # (N,H,W,C)
    y_onehot = jnp.transpose(y_onehot, (0, 3, 1, 2))              # (N,C,H,W)

    p = jax.nn.softmax(x, axis=1)
    axes = (0, 2, 3)
    tp = jnp.sum(p * y_onehot, axis=axes)
    fp = jnp.sum(p * (1.0 - y_onehot), axis=axes)
    fn = jnp.sum((1.0 - p) * y_onehot, axis=axes)
    numerator = 2.0 * tp + 1e-05
    denominator = 2.0 * tp + fp + fn + 1e-05
    dc = numerator / (denominator + 1e-08)
    dc_loss = -jnp.mean(dc[1:])

    log_p = jax.nn.log_softmax(x, axis=1)
    ce = -jnp.take_along_axis(log_p, y, axis=1)
    ce_loss = jnp.mean(ce)
    return dc_loss + ce_loss


if __name__ == "__main__":
    key = jax.random.PRNGKey(0)
    kx, ky = jax.random.split(key)

    # Primary small-shape check (matches the module's expected layout).
    N, C, H, W = 2, 4, 16, 16
    x = jax.random.normal(kx, (N, C, H, W), dtype=jnp.float32)
    y = jax.random.randint(ky, (N, 1, H, W), 0, C, dtype=jnp.int32)

    loss = dice_ce_loss(x, y)
    loss = jax.block_until_ready(loss)
    ref = _reference_loss(x, y)
    assert jnp.allclose(loss, ref, atol=1e-4, rtol=1e-4), (loss, ref)

    # Secondary check: ragged spatial size + forced small tile exercises the
    # lane mask, partial boundary block and multi-shard accumulation paths.
    kx2, ky2 = jax.random.split(ky)
    H2, W2 = 20, 19
    x2 = jax.random.normal(kx2, (N, C, H2, W2), dtype=jnp.float32)
    y2 = jax.random.randint(ky2, (N, 1, H2, W2), 0, C, dtype=jnp.int32)
    loss2 = jax.block_until_ready(dice_ce_loss(x2, y2, max_tile=128))
    ref2 = _reference_loss(x2, y2)
    assert jnp.allclose(loss2, ref2, atol=1e-4, rtol=1e-4), (loss2, ref2)

    print("KERNEL_OK")
</pallas_src>

<mosaic_0001>
module attributes {stable_mosaic.version = 11 : i64} {
  func.func @_dice_ce_kernel(%arg0: i32, %arg1: i32, %arg2: i32, %arg3: memref<1x4x256xf32, #tpu.memory_space<vmem>>, %arg4: memref<1x1x256xi32, #tpu.memory_space<vmem>>, %arg5: memref<1x4x1xf32, #tpu.memory_space<vmem>>, %arg6: memref<1x4x1xf32, #tpu.memory_space<vmem>>, %arg7: memref<1x4x1xf32, #tpu.memory_space<vmem>>, %arg8: memref<1x1x1xf32, #tpu.memory_space<vmem>>) attributes {dimension_semantics = [#tpu.dimension_semantics<parallel>, #tpu.dimension_semantics<arbitrary>, #tpu.dimension_semantics<arbitrary>], iteration_bounds = array<i64: 1, 2, 1>, scalar_prefetch = 0 : i64, scratch_operands = 0 : i64, tpu.core_type = #tpu.core_type<tc>, window_params = [{transform_indices = @transform_0, window_bounds = array<i64: 1, 4, 256>}, {transform_indices = @transform_1, window_bounds = array<i64: 1, 1, 256>}, {transform_indices = @transform_2, window_bounds = array<i64: 1, 4, 1>}, {transform_indices = @transform_3, window_bounds = array<i64: 1, 4, 1>}, {transform_indices = @transform_4, window_bounds = array<i64: 1, 4, 1>}, {transform_indices = @transform_5, window_bounds = array<i64: 1, 1, 1>}]} {
    %c0_i32 = arith.constant 0 : i32
    %0 = arith.cmpi eq, %arg1, %c0_i32 : i32
    %c0_i32_0 = arith.constant 0 : i32
    %1 = arith.cmpi eq, %arg2, %c0_i32_0 : i32
    %2 = arith.andi %0, %1 : i1
    %3 = arith.extui %2 : i1 to i32
    %c0_i32_1 = arith.constant 0 : i32
    %4 = arith.cmpi ne, %3, %c0_i32_1 : i32
    scf.if %4 {
      %cst_40 = arith.constant 0.000000e+00 : f32
      %69 = vector.broadcast %cst_40 : f32 to vector<1x4x1xf32>
      %c0_41 = arith.constant 0 : index
      %c0_42 = arith.constant 0 : index
      %c0_43 = arith.constant 0 : index
      %70 = vector.load %arg5[%c0_41, %c0_42, %c0_43] : memref<1x4x1xf32, #tpu.memory_space<vmem>>, vector<1x4x1xf32>
      tpu.vector_store %arg5[%c0_41, %c0_42, %c0_43], %69 {strides = array<i32>} : memref<1x4x1xf32, #tpu.memory_space<vmem>>, vector<1x4x1xf32>,
      %cst_44 = arith.constant 0.000000e+00 : f32
      %71 = vector.broadcast %cst_44 : f32 to vector<1x4x1xf32>
      %c0_45 = arith.constant 0 : index
      %c0_46 = arith.constant 0 : index
      %c0_47 = arith.constant 0 : index
      %72 = vector.load %arg6[%c0_45, %c0_46, %c0_47] : memref<1x4x1xf32, #tpu.memory_space<vmem>>, vector<1x4x1xf32>
      tpu.vector_store %arg6[%c0_45, %c0_46, %c0_47], %71 {strides = array<i32>} : memref<1x4x1xf32, #tpu.memory_space<vmem>>, vector<1x4x1xf32>,
      %cst_48 = arith.constant 0.000000e+00 : f32
      %73 = vector.broadcast %cst_48 : f32 to vector<1x4x1xf32>
      %c0_49 = arith.constant 0 : index
      %c0_50 = arith.constant 0 : index
      %c0_51 = arith.constant 0 : index
      %74 = vector.load %arg7[%c0_49, %c0_50, %c0_51] : memref<1x4x1xf32, #tpu.memory_space<vmem>>, vector<1x4x1xf32>
      tpu.vector_store %arg7[%c0_49, %c0_50, %c0_51], %73 {strides = array<i32>} : memref<1x4x1xf32, #tpu.memory_space<vmem>>, vector<1x4x1xf32>,
      %cst_52 = arith.constant 0.000000e+00 : f32
      %75 = vector.broadcast %cst_52 : f32 to vector<1x1x1xf32>
      %c0_53 = arith.constant 0 : index
      %c0_54 = arith.constant 0 : index
      %c0_55 = arith.constant 0 : index
      %76 = vector.load %arg8[%c0_53, %c0_54, %c0_55] : memref<1x1x1xf32, #tpu.memory_space<vmem>>, vector<1x1x1xf32>
      tpu.vector_store %arg8[%c0_53, %c0_54, %c0_55], %75 {strides = array<i32>} : memref<1x1x1xf32, #tpu.memory_space<vmem>>, vector<1x1x1xf32>,
    } else {
    }
    %c0 = arith.constant 0 : index
    %c0_2 = arith.constant 0 : index
    %c0_3 = arith.constant 0 : index
    %5 = vector.load %arg3[%c0, %c0_2, %c0_3] : memref<1x4x256xf32, #tpu.memory_space<vmem>>, vector<1x4x256xf32>
    %c0_4 = arith.constant 0 : index
    %c0_5 = arith.constant 0 : index
    %c0_6 = arith.constant 0 : index
    %6 = vector.load %arg4[%c0_4, %c0_5, %c0_6] : memref<1x1x256xi32, #tpu.memory_space<vmem>>, vector<1x1x256xi32>
    %c1_i32 = arith.constant 1 : i32
    %7 = arith.muli %arg0, %c1_i32 : i32
    %8 = arith.addi %7, %arg2 : i32
    %c256_i32 = arith.constant 256 : i32
    %9 = arith.muli %8, %c256_i32 : i32
    %10 = tpu.iota {dimensions = array<i32: 2>} : vector<1x1x256xi32>
    %11 = vector.broadcast %9 : i32 to vector<1x1x256xi32>
    %12 = arith.addi %11, %10 : vector<1x1x256xi32>
    %c256_i32_7 = arith.constant 256 : i32
    %13 = vector.broadcast %c256_i32_7 : i32 to vector<1x1x256xi32>
    %14 = arith.cmpi slt, %12, %13 : vector<1x1x256xi32>
    %15 = arith.extui %14 : vector<1x1x256xi1> to vector<1x1x256xi32>
    %16 = arith.sitofp %15 : vector<1x1x256xi32> to vector<1x1x256xf32>
    %cst = arith.constant 0.000000e+00 : f32
    %17 = vector.shape_cast %14 : vector<1x1x256xi1> to vector<1x1x256xi1>
    %18 = vector.broadcast %17 : vector<1x1x256xi1> to vector<1x4x256xi1>
    %19 = vector.broadcast %cst : f32 to vector<1x4x256xf32>
    %20 = arith.select %18, %5, %19 : vector<1x4x256xi1>, vector<1x4x256xf32>
    %21 = tpu.iota {dimensions = array<i32: 1>} : vector<1x4x256xi32>
    %22 = vector.broadcast %6 : vector<1x1x256xi32> to vector<1x4x256xi32>
    %23 = arith.cmpi eq, %21, %22 : vector<1x4x256xi32>
    %24 = vector.broadcast %14 : vector<1x1x256xi1> to vector<1x4x256xi1>
    %25 = arith.andi %23, %24 : vector<1x4x256xi1>
    %26 = arith.extui %25 : vector<1x4x256xi1> to vector<1x4x256xi32>
    %27 = arith.sitofp %26 : vector<1x4x256xi32> to vector<1x4x256xf32>
    %cst_8 = arith.constant dense<0xFF800000> : vector<1x256xf32>
    %28 = vector.multi_reduction <maximumf>, %20, %cst_8 [1] : vector<1x4x256xf32> to vector<1x256xf32>
    %29 = vector.shape_cast %28 : vector<1x256xf32> to vector<1x1x256xf32>
    %30 = vector.broadcast %29 : vector<1x1x256xf32> to vector<1x4x256xf32>
    %31 = arith.subf %20, %30 : vector<1x4x256xf32>
    %32 = math.exp %31 : vector<1x4x256xf32>
    %cst_9 = arith.constant dense<0.000000e+00> : vector<1x256xf32>
    %33 = vector.multi_reduction <add>, %32, %cst_9 [1] : vector<1x4x256xf32> to vector<1x256xf32>
    %34 = vector.shape_cast %33 : vector<1x256xf32> to vector<1x1x256xf32>
    %cst_10 = arith.constant 1.000000e+00 : f32
    %35 = vector.broadcast %cst_10 : f32 to vector<1x1x256xf32>
    %36 = arith.divf %35, %34 : vector<1x1x256xf32>
    %37 = vector.broadcast %36 : vector<1x1x256xf32> to vector<1x4x256xf32>
    %38 = arith.mulf %32, %37 : vector<1x4x256xf32>
    %39 = vector.broadcast %16 : vector<1x1x256xf32> to vector<1x4x256xf32>
    %40 = arith.mulf %38, %39 : vector<1x4x256xf32>
    %c0_11 = arith.constant 0 : index
    %c0_12 = arith.constant 0 : index
    %c0_13 = arith.constant 0 : index
    %41 = vector.load %arg5[%c0_11, %c0_12, %c0_13] : memref<1x4x1xf32, #tpu.memory_space<vmem>>, vector<1x4x1xf32>
    %42 = arith.mulf %40, %27 : vector<1x4x256xf32>
    %cst_14 = arith.constant dense<0.000000e+00> : vector<1x4xf32>
    %43 = vector.multi_reduction <add>, %42, %cst_14 [2] : vector<1x4x256xf32> to vector<1x4xf32>
    %44 = vector.shape_cast %43 : vector<1x4xf32> to vector<1x4x1xf32>
    %45 = arith.addf %41, %44 : vector<1x4x1xf32>
    %c0_15 = arith.constant 0 : index
    %c0_16 = arith.constant 0 : index
    %c0_17 = arith.constant 0 : index
    %46 = vector.load %arg5[%c0_15, %c0_16, %c0_17] : memref<1x4x1xf32, #tpu.memory_space<vmem>>, vector<1x4x1xf32>
    tpu.vector_store %arg5[%c0_15, %c0_16, %c0_17], %45 {strides = array<i32>} : memref<1x4x1xf32, #tpu.memory_space<vmem>>, vector<1x4x1xf32>,
    %c0_18 = arith.constant 0 : index
    %c0_19 = arith.constant 0 : index
    %c0_20 = arith.constant 0 : index
    %47 = vector.load %arg6[%c0_18, %c0_19, %c0_20] : memref<1x4x1xf32, #tpu.memory_space<vmem>>, vector<1x4x1xf32>
    %cst_21 = arith.constant dense<0.000000e+00> : vector<1x4xf32>
    %48 = vector.multi_reduction <add>, %40, %cst_21 [2] : vector<1x4x256xf32> to vector<1x4xf32>
    %49 = vector.shape_cast %48 : vector<1x4xf32> to vector<1x4x1xf32>
    %50 = arith.addf %47, %49 : vector<1x4x1xf32>
    %c0_22 = arith.constant 0 : index
    %c0_23 = arith.constant 0 : index
    %c0_24 = arith.constant 0 : index
    %51 = vector.load %arg6[%c0_22, %c0_23, %c0_24] : memref<1x4x1xf32, #tpu.memory_space<vmem>>, vector<1x4x1xf32>
    tpu.vector_store %arg6[%c0_22, %c0_23, %c0_24], %50 {strides = array<i32>} : memref<1x4x1xf32, #tpu.memory_space<vmem>>, vector<1x4x1xf32>,
    %c0_25 = arith.constant 0 : index
    %c0_26 = arith.constant 0 : index
    %c0_27 = arith.constant 0 : index
    %52 = vector.load %arg7[%c0_25, %c0_26, %c0_27] : memref<1x4x1xf32, #tpu.memory_space<vmem>>, vector<1x4x1xf32>
    %cst_28 = arith.constant dense<0.000000e+00> : vector<1x4xf32>
    %53 = vector.multi_reduction <add>, %27, %cst_28 [2] : vector<1x4x256xf32> to vector<1x4xf32>
    %54 = vector.shape_cast %53 : vector<1x4xf32> to vector<1x4x1xf32>
    %55 = arith.addf %52, %54 : vector<1x4x1xf32>
    %c0_29 = arith.constant 0 : index
    %c0_30 = arith.constant 0 : index
    %c0_31 = arith.constant 0 : index
    %56 = vector.load %arg7[%c0_29, %c0_30, %c0_31] : memref<1x4x1xf32, #tpu.memory_space<vmem>>, vector<1x4x1xf32>
    tpu.vector_store %arg7[%c0_29, %c0_30, %c0_31], %55 {strides = array<i32>} : memref<1x4x1xf32, #tpu.memory_space<vmem>>, vector<1x4x1xf32>,
    %57 = arith.mulf %20, %27 : vector<1x4x256xf32>
    %cst_32 = arith.constant dense<0.000000e+00> : vector<1x256xf32>
    %58 = vector.multi_reduction <add>, %57, %cst_32 [1] : vector<1x4x256xf32> to vector<1x256xf32>
    %59 = vector.shape_cast %58 : vector<1x256xf32> to vector<1x1x256xf32>
    %60 = math.log %34 : vector<1x1x256xf32>
    %61 = arith.addf %29, %60 : vector<1x1x256xf32>
    %62 = arith.mulf %61, %16 : vector<1x1x256xf32>
    %63 = arith.subf %62, %59 : vector<1x1x256xf32>
    %c0_33 = arith.constant 0 : index
    %c0_34 = arith.constant 0 : index
    %c0_35 = arith.constant 0 : index
    %64 = vector.load %arg8[%c0_33, %c0_34, %c0_35] : memref<1x1x1xf32, #tpu.memory_space<vmem>>, vector<1x1x1xf32>
    %cst_36 = arith.constant dense<0.000000e+00> : vector<1x1xf32>
    %65 = vector.multi_reduction <add>, %63, %cst_36 [2] : vector<1x1x256xf32> to vector<1x1xf32>
    %66 = vector.shape_cast %65 : vector<1x1xf32> to vector<1x1x1xf32>
    %67 = arith.addf %64, %66 : vector<1x1x1xf32>
    %c0_37 = arith.constant 0 : index
    %c0_38 = arith.constant 0 : index
    %c0_39 = arith.constant 0 : index
    %68 = vector.load %arg8[%c0_37, %c0_38, %c0_39] : memref<1x1x1xf32, #tpu.memory_space<vmem>>, vector<1x1x1xf32>
    tpu.vector_store %arg8[%c0_37, %c0_38, %c0_39], %67 {strides = array<i32>} : memref<1x1x1xf32, #tpu.memory_space<vmem>>, vector<1x1x1xf32>,
    return
  }
  func.func @transform_0(%arg0: i32, %arg1: i32, %arg2: i32) -> (i32, i32, i32) {
    %c1_i32 = arith.constant 1 : i32
    %0 = arith.muli %arg0, %c1_i32 : i32
    %1 = arith.addi %0, %arg2 : i32
    %c0_i32 = arith.constant 0 : i32
    %2 = arith.minsi %1, %c0_i32 : i32
    %c0_i32_0 = arith.constant 0 : i32
    %c0_i32_1 = arith.constant 0 : i32
    return %arg1, %c0_i32_0, %2 : i32, i32, i32
  }
  func.func @transform_1(%arg0: i32, %arg1: i32, %arg2: i32) -> (i32, i32, i32) {
    %c1_i32 = arith.constant 1 : i32
    %0 = arith.muli %arg0, %c1_i32 : i32
    %1 = arith.addi %0, %arg2 : i32
    %c0_i32 = arith.constant 0 : i32
    %2 = arith.minsi %1, %c0_i32 : i32
    %c0_i32_0 = arith.constant 0 : i32
    %c0_i32_1 = arith.constant 0 : i32
    return %arg1, %c0_i32_0, %2 : i32, i32, i32
  }
  func.func @transform_2(%arg0: i32, %arg1: i32, %arg2: i32) -> (i32, i32, i32) {
    %c0_i32 = arith.constant 0 : i32
    %c0_i32_0 = arith.constant 0 : i32
    %c0_i32_1 = arith.constant 0 : i32
    return %arg0, %c0_i32, %c0_i32_0 : i32, i32, i32
  }
  func.func @transform_3(%arg0: i32, %arg1: i32, %arg2: i32) -> (i32, i32, i32) {
    %c0_i32 = arith.constant 0 : i32
    %c0_i32_0 = arith.constant 0 : i32
    %c0_i32_1 = arith.constant 0 : i32
    return %arg0, %c0_i32, %c0_i32_0 : i32, i32, i32
  }
  func.func @transform_4(%arg0: i32, %arg1: i32, %arg2: i32) -> (i32, i32, i32) {
    %c0_i32 = arith.constant 0 : i32
    %c0_i32_0 = arith.constant 0 : i32
    %c0_i32_1 = arith.constant 0 : i32
    return %arg0, %c0_i32, %c0_i32_0 : i32, i32, i32
  }
  func.func @transform_5(%arg0: i32, %arg1: i32, %arg2: i32) -> (i32, i32, i32) {
    %c0_i32 = arith.constant 0 : i32
    %c0_i32_0 = arith.constant 0 : i32
    %c0_i32_1 = arith.constant 0 : i32
    return %arg0, %c0_i32, %c0_i32_0 : i32, i32, i32
  }
}

</mosaic_0001>

<llo_original>
// kernel: tpu_custom_call.1
$region0: #{tpu_custom_call.1}
  #allocation0 [shape = 'u32[]', space=smem, size = 0x4, offset = 0x4, fixed_abs, tag = 'smem constant byte address 0x4 - core index']
  #allocation1 [shape = 'u32[72,128]{1,0:T(1,128)}', space=vmem, size = 0x9000, scoped, tag = 'internal scratch']
  %s0 = inlined_call_operand.hbm [shape: f32[2,4,256], index: 0, kind: input, shape index: {}]
  %s1 = inlined_call_operand.hbm [shape: s32[2,1,256], index: 1, kind: input, shape index: {}]
  %s2 = inlined_call_operand.vmem [shape: f32[1,4,1], index: 2, kind: output, shape index: {0}]
  %s3 = inlined_call_operand.vmem [shape: f32[1,4,1], index: 3, kind: output, shape index: {1}]
  %s4 = inlined_call_operand.vmem [shape: f32[1,4,1], index: 4, kind: output, shape index: {2}]
  %s5 = inlined_call_operand.hbm [shape: f32[1,1,1], index: 5, kind: output, shape index: {3}]
  %6 = xla_tuple %s2, %s3, %s4, %s5
  %s7 = sld [smem:[#allocation0]]
  $region77: #{tpu_custom_call.1} parent=0
    _
  %s9 = ssub.s32 1, %s7
  %s10 = scalar_select 0, %s9, %s7
  $region1: #{tpu_custom_call.1} parent=0
    #allocation2 [shape = 'u8[8192]{0}', space=vmem, size = 0x2000, scoped, tag = 'input window, operand 0']
    #allocation3 [shape = 's32[2]{0}', space=sflag, size = 0x8, scoped, tag = 'scoped memory for tpu_custom_call.1']
    #allocation4 [shape = 's32[2]{0}', space=sflag, size = 0x8, scoped, tag = 'scoped memory for tpu_custom_call.1']
    #allocation5 [shape = 'u8[2048]{0}', space=vmem, size = 0x800, scoped, tag = 'input window, operand 1']
    #allocation6 [shape = 's32[2]{0}', space=sflag, size = 0x8, scoped, tag = 'scoped memory for tpu_custom_call.1']
    #allocation7 [shape = 'u8[512]{0}', space=vmem, size = 0x400, scoped, tag = 'output window, operand 3, single buffered']
    %11 = vsyncpa [#allocation3], 0
    %s12 = scalar_lea.sflag [#allocation3], 1
    %13 = vsyncpa %s12, 0
    %14 = vsyncpa [#allocation6], 0
    %s15 = scalar_lea.sflag [#allocation6], 1
    %16 = vsyncpa %s15, 0
    %17 = vsyncpa [#allocation4], 0
    loop: start=0, step=1, limit=4
    $region2: #{tpu_custom_call.1} parent=1 // loop_pre_header
      _
    $region3: #{tpu_custom_call.1} parent=1 // loop_header
      %s19 = sphi 0, %s23
      %p20 = scmp.ge.s32.totalorder %s19, 4
      %s26 = sphi 0, %s45
      %s27 = sphi 0, %s41
      %s28 = sphi 0, %s37
      %s29 = sphi 0, %s26
      %s30 = sphi 0, %s27
      %s31 = sphi 0, %s28
      %s32 = sphi 0, %s29
      %s33 = sphi 0, %s30
      %s34 = sphi 0, %s31
      %s56 = sphi 0, %s58
      %s59 = sphi 0, %s56
      %s60 = sphi 0, %s59
      %s76 = sphi 0, %s60
      %s90 = sphi 0, %s92
      %s93 = sphi 0, %s90
      %s94 = sphi 0, %s93
      %s110 = sphi 0, %s94
      %s116 = sphi 0, %s118
      %s119 = sphi 0, %s116
      %s120 = sphi 0, %s119
      %s136 = sphi 0, %s120
      %s142 = sphi 0, %s144
      %s145 = sphi 0, %s142
      %s146 = sphi 0, %s145
      %s162 = sphi 0, %s146
      %s168 = sphi 0, %s170
      %s171 = sphi 0, %s168
      %s172 = sphi 0, %s171
      %s188 = sphi 0, %s172
      %s194 = sphi 0, %s196
      %s197 = sphi 0, %s194
      %s198 = sphi 0, %s197
      %s214 = sphi 0, %s198
    $region4: #{tpu_custom_call.1} parent=1 // loop_header_branch
      %22 = sbr.rel (%p20) target = $region8
    $region5: #{tpu_custom_call.1} parent=1 // loop_body
      %s24 = ssub.s32 %s19, 1
      %s25 = ssub.s32 %s19, 2
      %s35 = sadd.s32 1, %s28
      %p36 = scmp.ge.s32.totalorder %s35, 1
      %s37 = scalar_select %p36, 0, %s35
      %s38 = sadd.s32 1, %s27
      %s39 = scalar_select %p36, %s38, %s27
      %p40 = scmp.ge.s32.totalorder %s39, 2
      %s41 = scalar_select %p40, 0, %s39
      %s42 = sadd.s32 1, %s26
      %s43 = scalar_select %p40, %s42, %s26
      %p44 = scmp.ge.s32.totalorder %s43, 1
      %s45 = scalar_select %p44, 0, %s43
      %s46 = sadd.s32 %s26, %s28
      %p47 = scmp.lt.s32.totalorder %s46, 0
      %s48 = scalar_select %p47, %s46, 0
      %s49 = sadd.s32 %s45, %s37
      %p50 = scmp.lt.s32.totalorder %s49, 0
      %s51 = scalar_select %p50, %s49, 0
      %s52 = ssub.s32 %s27, %s41
      %s53 = ssub.s32 %s48, %s51
      %s54 = sor.u32 %s52, %s53
      %p55 = scmp.eq.s32.totalorder %s54, 0
      %s57 = sadd.s32 %s56, 1
      %s58 = scalar_select %p55, %s56, %s57
      %p61 = pneg %p55
      %p62 = scmp.eq.s32.totalorder %s19, 1
      %p63 = por %p61, %p62
      %p64 = scmp.ne.s32.totalorder %s56, %s59
      %p65 = scmp.eq.s32.totalorder %s19, 0
      %p66 = por %p64, %p65
      %p67 = scmp.ne.s32.totalorder %s56, %s59
      %p68 = scmp.eq.s32.totalorder %s24, 1
      %p69 = por %p67, %p68
      %p70 = scmp.ne.s32.totalorder %s59, %s60
      %p71 = scmp.eq.s32.totalorder %s24, 0
      %p72 = por %p70, %p71
      %p73 = scmp.ne.s32.totalorder %s59, %s60
      %p74 = scmp.eq.s32.totalorder %s25, 1
      %p75 = por %p73, %p74
      %p77 = scmp.ne.s32.totalorder %s60, %s76
      %p78 = scmp.eq.s32.totalorder %s25, 0
      %p79 = por %p77, %p78
      %s80 = sadd.s32 %s26, %s28
      %p81 = scmp.lt.s32.totalorder %s80, 0
      %s82 = scalar_select %p81, %s80, 0
      %s83 = sadd.s32 %s45, %s37
      %p84 = scmp.lt.s32.totalorder %s83, 0
      %s85 = scalar_select %p84, %s83, 0
      %s86 = ssub.s32 %s27, %s41
      %s87 = ssub.s32 %s82, %s85
      %s88 = sor.u32 %s86, %s87
      %p89 = scmp.eq.s32.totalorder %s88, 0
      %s91 = sadd.s32 %s90, 1
      %s92 = scalar_select %p89, %s90, %s91
      %p95 = pneg %p89
      %p96 = scmp.eq.s32.totalorder %s19, 1
      %p97 = por %p95, %p96
      %p98 = scmp.ne.s32.totalorder %s90, %s93
      %p99 = scmp.eq.s32.totalorder %s19, 0
      %p100 = por %p98, %p99
      %p101 = scmp.ne.s32.totalorder %s90, %s93
      %p102 = scmp.eq.s32.totalorder %s24, 1
      %p103 = por %p101, %p102
      %p104 = scmp.ne.s32.totalorder %s93, %s94
      %p105 = scmp.eq.s32.totalorder %s24, 0
      %p106 = por %p104, %p105
      %p107 = scmp.ne.s32.totalorder %s93, %s94
      %p108 = scmp.eq.s32.totalorder %s25, 1
      %p109 = por %p107, %p108
      %p111 = scmp.ne.s32.totalorder %s94, %s110
      %p112 = scmp.eq.s32.totalorder %s25, 0
      %p113 = por %p111, %p112
      %s114 = ssub.s32 %s26, %s45
      %p115 = scmp.eq.s32.totalorder %s114, 0
      %s117 = sadd.s32 %s116, 1
      %s118 = scalar_select %p115, %s116, %s117
      %p121 = pneg %p115
      %p122 = scmp.eq.s32.totalorder %s19, 1
      %p123 = por %p121, %p122
      %p124 = scmp.ne.s32.totalorder %s116, %s119
      %p125 = scmp.eq.s32.totalorder %s19, 0
      %p126 = por %p124, %p125
      %p127 = scmp.ne.s32.totalorder %s116, %s119
      %p128 = scmp.eq.s32.totalorder %s24, 1
      %p129 = por %p127, %p128
      %p130 = scmp.ne.s32.totalorder %s119, %s120
      %p131 = scmp.eq.s32.totalorder %s24, 0
      %p132 = por %p130, %p131
      %p133 = scmp.ne.s32.totalorder %s119, %s120
      %p134 = scmp.eq.s32.totalorder %s25, 1
      %p135 = por %p133, %p134
      %p137 = scmp.ne.s32.totalorder %s120, %s136
      %p138 = scmp.eq.s32.totalorder %s25, 0
      %p139 = por %p137, %p138
      %s140 = ssub.s32 %s26, %s45
      %p141 = scmp.eq.s32.totalorder %s140, 0
      %s143 = sadd.s32 %s142, 1
      %s144 = scalar_select %p141, %s142, %s143
      %p147 = pneg %p141
      %p148 = scmp.eq.s32.totalorder %s19, 1
      %p149 = por %p147, %p148
      %p150 = scmp.ne.s32.totalorder %s142, %s145
      %p151 = scmp.eq.s32.totalorder %s19, 0
      %p152 = por %p150, %p151
      %p153 = scmp.ne.s32.totalorder %s142, %s145
      %p154 = scmp.eq.s32.totalorder %s24, 1
      %p155 = por %p153, %p154
      %p156 = scmp.ne.s32.totalorder %s145, %s146
      %p157 = scmp.eq.s32.totalorder %s24, 0
      %p158 = por %p156, %p157
      %p159 = scmp.ne.s32.totalorder %s145, %s146
      %p160 = scmp.eq.s32.totalorder %s25, 1
      %p161 = por %p159, %p160
      %p163 = scmp.ne.s32.totalorder %s146, %s162
      %p164 = scmp.eq.s32.totalorder %s25, 0
      %p165 = por %p163, %p164
      %s166 = ssub.s32 %s26, %s45
      %p167 = scmp.eq.s32.totalorder %s166, 0
      %s169 = sadd.s32 %s168, 1
      %s170 = scalar_select %p167, %s168, %s169
      %p173 = pneg %p167
      %p174 = scmp.eq.s32.totalorder %s19, 1
      %p175 = por %p173, %p174
      %p176 = scmp.ne.s32.totalorder %s168, %s171
      %p177 = scmp.eq.s32.totalorder %s19, 0
      %p178 = por %p176, %p177
      %p179 = scmp.ne.s32.totalorder %s168, %s171
      %p180 = scmp.eq.s32.totalorder %s24, 1
      %p181 = por %p179, %p180
      %p182 = scmp.ne.s32.totalorder %s171, %s172
      %p183 = scmp.eq.s32.totalorder %s24, 0
      %p184 = por %p182, %p183
      %p185 = scmp.ne.s32.totalorder %s171, %s172
      %p186 = scmp.eq.s32.totalorder %s25, 1
      %p187 = por %p185, %p186
      %p189 = scmp.ne.s32.totalorder %s172, %s188
      %p190 = scmp.eq.s32.totalorder %s25, 0
      %p191 = por %p189, %p190
      %s192 = ssub.s32 %s26, %s45
      %p193 = scmp.eq.s32.totalorder %s192, 0
      %s195 = sadd.s32 %s194, 1
      %s196 = scalar_select %p193, %s194, %s195
      %p199 = pneg %p193
      %p200 = scmp.eq.s32.totalorder %s19, 1
      %p201 = por %p199, %p200
      %p202 = scmp.ne.s32.totalorder %s194, %s197
      %p203 = scmp.eq.s32.totalorder %s19, 0
      %p204 = por %p202, %p203
      %p205 = scmp.ne.s32.totalorder %s194, %s197
      %p206 = scmp.eq.s32.totalorder %s24, 1
      %p207 = por %p205, %p206
      %p208 = scmp.ne.s32.totalorder %s197, %s198
      %p209 = scmp.eq.s32.totalorder %s24, 0
      %p210 = por %p208, %p209
      %p211 = scmp.ne.s32.totalorder %s197, %s198
      %p212 = scmp.eq.s32.totalorder %s25, 1
      %p213 = por %p211, %p212
      %p215 = scmp.ne.s32.totalorder %s198, %s214
      %p216 = scmp.eq.s32.totalorder %s25, 0
      %p217 = por %p215, %p216
      %p218 = scmp.le.s32.totalorder 1, %s19
      %p219 = scmp.lt.s32.totalorder %s19, 3
      %p220 = pnand %p218, %p219
      %p221 = pneg %p220
      // Predicated region
      $region9: #{tpu_custom_call.1} parent=5 // pred_check
        _
      $region10: #{tpu_custom_call.1} parent=5 // pred_check_branch
        %223 = sbr.rel (%p220) target = $region12
      $region11: #{tpu_custom_call.1} parent=5 // pred_region
        %s224 = ssub.s32 %s19, 1
      $region12: #{tpu_custom_call.1} parent=5 // pred_fallthru
        _
      %p225 = scmp.lt.s32.totalorder %s19, 2
      // Predicated region
      $region13: #{tpu_custom_call.1} parent=5 // pred_check
        %p226 = pneg %p225
      $region14: #{tpu_custom_call.1} parent=5 // pred_check_branch
        %228 = sbr.rel (%p226) target = $region16
      $region15: #{tpu_custom_call.1} parent=5 // pred_region
        // Predicated region
        $region17: #{tpu_custom_call.1} parent=15 // pred_check
          %p229 = pneg %p66
        $region18: #{tpu_custom_call.1} parent=15 // pred_check_branch
          %231 = sbr.rel (%p229) target = $region20
        $region19: #{tpu_custom_call.1} parent=15 // pred_region
          %s232 = sand.u32 %s56, 1
          %s233 = scalar_lea.sflag [#allocation3], %s232
          %s234 = sand.u32 %s56, 1
          %s235 = smul.addr %s234, 8
          %s236 = scalar_lea.vmem [#allocation2], %s235
          %s237 = sadd.s32 %s26, %s28
          %p238 = scmp.lt.s32.totalorder %s237, 0
          %s239 = scalar_select %p238, %s237, 0
          %s240 = smul.u32 2, %s239
          %242 = vsyncadd %s233, 0
          %s243 = smul.addr %s27, 2
          %s244 = sadd.s32 %s240, %s243
          %s245 = smul.addr %s244, 4
          %s246 = scalar_lea.hbm %s0, %s245
          %s248 = sshll.u32 %s246, 4
          %s249 = int_to_ptr.hbm [resolvable:$true] %s248
          %s250 = sshll.u32 %s236, 4
          %s251 = int_to_ptr.vmem [resolvable:$true] %s250
          %253 = dma.hbm_to_vmem [thread:$0]  %s249, 128, %s251, %s233
        $region20: #{tpu_custom_call.1} parent=15 // pred_fallthru
          _
        // Predicated region
        $region21: #{tpu_custom_call.1} parent=15 // pred_check
          %p254 = pneg %p100
        $region22: #{tpu_custom_call.1} parent=15 // pred_check_branch
          %256 = sbr.rel (%p254) target = $region24
        $region23: #{tpu_custom_call.1} parent=15 // pred_region
          %s257 = sand.u32 %s90, 1
          %s258 = scalar_lea.sflag [#allocation6], %s257
          %s259 = sand.u32 %s90, 1
          %s260 = smul.addr %s259, 2
          %s261 = scalar_lea.vmem [#allocation5], %s260
          %s262 = sadd.s32 %s26, %s28
          %p263 = scmp.lt.s32.totalorder %s262, 0
          %s264 = scalar_select %p263, %s262, 0
          %s265 = smul.u32 2, %s264
          %267 = vsyncadd %s258, 0
          %s268 = smul.addr %s27, 2
          %s269 = sadd.s32 %s265, %s268
          %s270 = scalar_lea.hbm %s1, %s269
          %s272 = sshll.u32 %s270, 4
          %s273 = int_to_ptr.hbm [resolvable:$true] %s272
          %s274 = sshll.u32 %s261, 4
          %s275 = int_to_ptr.vmem [resolvable:$true] %s274
          %277 = dma.hbm_to_vmem [thread:$0]  %s273, 32, %s275, %s258
        $region24: #{tpu_custom_call.1} parent=15 // pred_fallthru
          _
      $region16: #{tpu_custom_call.1} parent=5 // pred_fallthru
        _
      %p278 = scmp.le.s32.totalorder 1, %s19
      %p279 = scmp.lt.s32.totalorder %s19, 3
      %p280 = pnand %p278, %p279
      %p281 = pneg %p280
      // Predicated region
      $region25: #{tpu_custom_call.1} parent=5 // pred_check
        _
      $region26: #{tpu_custom_call.1} parent=5 // pred_check_branch
        %283 = sbr.rel (%p280) target = $region28
      $region27: #{tpu_custom_call.1} parent=5 // pred_region
        %s284 = ssub.s32 %s19, 1
        %s285 = sand.u32 %s59, 1
        %s286 = scalar_lea.sflag [#allocation3], %s285
        %s287 = sand.u32 %s59, 1
        %s288 = smul.addr %s287, 8
        %s289 = scalar_lea.vmem [#allocation2], %s288
        // Predicated region
        $region29: #{tpu_custom_call.1} parent=27 // pred_check
          %p290 = pneg %p72
        $region30: #{tpu_custom_call.1} parent=27 // pred_check_branch
          %292 = sbr.rel (%p290) target = $region32
        $region31: #{tpu_custom_call.1} parent=27 // pred_region
          %294 = dma.done %s286, 128
        $region32: #{tpu_custom_call.1} parent=27 // pred_fallthru
          _
        %s295 = sand.u32 %s93, 1
        %s296 = scalar_lea.sflag [#allocation6], %s295
        %s297 = sand.u32 %s93, 1
        %s298 = smul.addr %s297, 2
        %s299 = scalar_lea.vmem [#allocation5], %s298
        // Predicated region
        $region33: #{tpu_custom_call.1} parent=27 // pred_check
          %p300 = pneg %p106
        $region34: #{tpu_custom_call.1} parent=27 // pred_check_branch
          %302 = sbr.rel (%p300) target = $region36
        $region35: #{tpu_custom_call.1} parent=27 // pred_region
          %304 = dma.done %s296, 32
        $region36: #{tpu_custom_call.1} parent=27 // pred_fallthru
          _
        %s305 = sand.u32 %s59, 1
        %s306 = scalar_lea.sflag [#allocation3], %s305
        %s307 = sand.u32 %s59, 1
        %s308 = smul.addr %s307, 8
        %s309 = scalar_lea.vmem [#allocation2], %s308
        %p310 = pneg %p72
        %p311 = pneg %p69
        %s312 = sand.u32 %s93, 1
        %s313 = scalar_lea.sflag [#allocation6], %s312
        %s314 = sand.u32 %s93, 1
        %s315 = smul.addr %s314, 2
        %s316 = scalar_lea.vmem [#allocation5], %s315
        %p317 = pneg %p106
        %p318 = pneg %p103
        %p319 = pneg %p132
        %p320 = pneg %p129
        %p321 = scmp.lt.s32.totalorder %s29, 0
        %s322 = scalar_select %p321, %s29, 0
        %s323 = smul.addr %s322, 4
        %s324 = scalar_lea.vmem %s2, %s323
        %p325 = pneg %p158
        %p326 = pneg %p155
        %p327 = scmp.lt.s32.totalorder %s29, 0
        %s328 = scalar_select %p327, %s29, 0
        %s329 = smul.addr %s328, 4
        %s330 = scalar_lea.vmem %s3, %s329
        %p331 = pneg %p184
        %p332 = pneg %p181
        %p333 = scmp.lt.s32.totalorder %s29, 0
        %s334 = scalar_select %p333, %s29, 0
        %s335 = smul.addr %s334, 4
        %s336 = scalar_lea.vmem %s4, %s335
        %p337 = pneg %p210
        %p338 = pneg %p207
        %s339 = sadd.s32 %s29, %s31
        %p340 = scmp.lt.s32.totalorder %s339, 0
        %s341 = scalar_select %p340, %s339, 0
        %s342 = smul.u32 2, %s341
        %s343 = sadd.s32 %s29, %s31
        %p344 = scmp.lt.s32.totalorder %s343, 0
        %s345 = scalar_select %p344, %s343, 0
        %s346 = smul.u32 2, %s345
        %p347 = scmp.lt.s32.totalorder %s29, 0
        %s348 = scalar_select %p347, %s29, 0
        %s349 = smul.addr %s348, 4
        %s350 = scalar_lea.vmem %s2, %s349
        %p351 = scmp.lt.s32.totalorder %s29, 0
        %s352 = scalar_select %p351, %s29, 0
        %s353 = smul.addr %s352, 4
        %s354 = scalar_lea.vmem %s3, %s353
        %p355 = scmp.lt.s32.totalorder %s29, 0
        %s356 = scalar_select %p355, %s29, 0
        %s357 = smul.addr %s356, 4
        %s358 = scalar_lea.vmem %s4, %s357
        %p359 = scmp.eq.s32.totalorder %s30, 0
        %p360 = scmp.eq.s32.totalorder %s31, 0
        %p361 = pnand %p359, %p360
        %p362 = pneg %p361
        // Predicated region
        $region37: #{tpu_custom_call.1} parent=27 // pred_check
          _
        $region38: #{tpu_custom_call.1} parent=27 // pred_check_branch
          %364 = sbr.rel (%p361) target = $region40
        $region39: #{tpu_custom_call.1} parent=27 // pred_region
          %vm365 = vcmask 3072
          %366 = vst.msk [vmem:[%s350] sm:$0xf] %vm365, 0.0
          %367 = vst.msk [vmem:[%s354] sm:$0xf] %vm365, 0.0
          %368 = vst.msk [vmem:[%s358] sm:$0xf] %vm365, 0.0
          %vm369 = vcmask 0
          %370 = vst.msk [vmem:[#allocation7] sm:$0x1] %vm369, 0.0
        $region40: #{tpu_custom_call.1} parent=27 // pred_fallthru
          _
        %v371 = vld [vmem:[%s289] sm:$0xff]
        %v372 = vld [vmem:[%s299] sm:$0x3]
        %s373 = sadd.s32 %s29, %s31
        %s374 = smul.u32 %s373, 256
        %v375 = vlaneseq
        %v376 = vand.u32 %v375, 127
        %v377 = vadd.s32 %v376, 128
        %v378 = vstv %s374
        %v379 = vadd.s32 %v378, %v376
        %v380 = vadd.s32 %v378, %v377
        %vm381 = vcmp.lt.s32.totalorder %v379, 256
        %vm382 = vcmp.lt.s32.totalorder %v380, 256
        %v383 = vsel %vm381, 1, 0
        %v384 = vsel %vm382, 1, 0
        %v385 = vcvt.s32.f32 %v383
        %v386 = vcvt.s32.f32 %v384
        %vm387 = vcmp.eq.s32.totalorder %v383, 1
        %vm388 = vcmp.eq.s32.totalorder %v384, 1
        %390 = vst [vmem:[#allocation1] ss:$2 sm:$0xff] %v371
        %v391 = vld.sshfl [vmem:[#allocation1] sm:$0xff pattern:$0x75316420]
        %v392 = vld.sshfl [vmem:[#allocation1 + $0x8] sm:$0xff pattern:$0x75316420]
        %v395 = vsel %vm387, %v391, 0.0
        %v396 = vsel %vm388, %v392, 0.0
        %v397 = vlaneseq
        %v398 = vshrl.u32 %v397, 7
        %v399 = vperm.slane %v372, 0
        %v400 = vperm.slane %v372, 1
        %vm401 = vcmp.eq.s32.totalorder %v398, %v399
        %vm402 = vcmp.eq.s32.totalorder %v398, %v400
        %vm403 = vmand %vm401, %vm387
        %vm404 = vmand %vm402, %vm388
        %v405 = vsel %vm403, 1, 0
        %v406 = vsel %vm404, 1, 0
        %v407 = vcvt.s32.f32 %v405
        %v408 = vcvt.s32.f32 %v406
        %vm409 = vcmask 1043456
        %v410 = vsel %vm409, %v395, -inf
        %v411 = vrot.slane %v410, 4
        %v412 = vmax.f32 %v410, %v411
        %v413 = vrot.slane %v412, 2
        %v414 = vmax.f32 %v412, %v413
        %v415 = vrot.slane %v414, 1
        %v416 = vmax.f32 %v414, %v415
        %v417 = vsel %vm409, %v396, -inf
        %v418 = vrot.slane %v417, 4
        %v419 = vmax.f32 %v417, %v418
        %v420 = vrot.slane %v419, 2
        %v421 = vmax.f32 %v419, %v420
        %v422 = vrot.slane %v421, 1
        %v423 = vmax.f32 %v421, %v422
        %v424 = vsub.f32 %v395, %v416
        %v425 = vsub.f32 %v396, %v423
        %v426 = vmul.f32 %v424, 1.442695
        %v427 = vpow.pop %v426
        %v428 = vmul.f32 %v425, 1.442695
        %v429 = vpow.pop %v428
        %v430 = vsel %vm409, %v427, 0.0
        %v431 = vrot.slane %v430, 4
        %v432 = vadd.f32 %v430, %v431
        %v433 = vrot.slane %v432, 2
        %v434 = vadd.f32 %v432, %v433
        %v435 = vrot.slane %v434, 1
        %v436 = vadd.f32 %v434, %v435
        %v437 = vsel %vm409, %v429, 0.0
        %v438 = vrot.slane %v437, 4
        %v439 = vadd.f32 %v437, %v438
        %v440 = vrot.slane %v439, 2
        %v441 = vadd.f32 %v439, %v440
        %v442 = vrot.slane %v441, 1
        %v443 = vadd.f32 %v441, %v442
        %v444 = vrcp.pop %v436
        %v445 = vmul.f32 %v436, %v444
        %v446 = vsub.f32 1.0, %v445
        %v447 = vmul.f32 %v444, %v446
        %v448 = vadd.f32 %v444, %v447
        %vm449 = vweird.f32 %v436
        %vm450 = vweird.f32 %v444
        %vm451 = vmor %vm449, %vm450
        %v452 = vsel %vm451, %v444, %v448
        %v453 = vand.u32 2147483647, %v436
        %vm454 = vcmp.eq.f32.partialorder %v453, 8.507059e+37
        %v455 = vand.u32 %v436, 2147483648
        %v456 = vor.u32 1.1754944e-38, %v455
        %v457 = vsel %vm454, %v456, %v452
        %v458 = vmul.f32 1.0, %v457
        %v459 = vrcp.pop %v443
        %v460 = vmul.f32 %v443, %v459
        %v461 = vsub.f32 1.0, %v460
        %v462 = vmul.f32 %v459, %v461
        %v463 = vadd.f32 %v459, %v462
        %vm464 = vweird.f32 %v443
        %vm465 = vweird.f32 %v459
        %vm466 = vmor %vm464, %vm465
        %v467 = vsel %vm466, %v459, %v463
        %v468 = vand.u32 2147483647, %v443
        %vm469 = vcmp.eq.f32.partialorder %v468, 8.507059e+37
        %v470 = vand.u32 %v443, 2147483648
        %v471 = vor.u32 1.1754944e-38, %v470
        %v472 = vsel %vm469, %v471, %v467
        %v473 = vmul.f32 1.0, %v472
        %v474 = vmul.f32 %v427, %v458
        %v475 = vmul.f32 %v429, %v473
        %v476 = vmul.f32 %v474, %v385
        %v477 = vmul.f32 %v475, %v386
        %v478 = vld [vmem:[%s350] sm:$0xf]
        %v479 = vmul.f32 %v476, %v407
        %v480 = vmul.f32 %v477, %v408
        %v481 = vsel %vm409, %v479, 0.0
        %v482 = vsel %vm409, %v480, 0.0
        %v483 = vadd.f32 %v481, %v482
        %484 = vadd.xlane.f32.xlu0 %v483
        %v485 = vpop.xlane.xlu0 %484
        %v486 = vadd.f32 %v478, %v485
        %vm487 = vcmask 3072
        %488 = vst.msk [vmem:[%s350] sm:$0xf] %vm487, %v486
        %v489 = vld [vmem:[%s354] sm:$0xf]
        %v490 = vsel %vm409, %v476, 0.0
        %v491 = vsel %vm409, %v477, 0.0
        %v492 = vadd.f32 %v490, %v491
        %493 = vadd.xlane.f32.xlu0 %v492
        %v494 = vpop.xlane.xlu0 %493
        %v495 = vadd.f32 %v489, %v494
        %496 = vst.msk [vmem:[%s354] sm:$0xf] %vm487, %v495
        %v497 = vld [vmem:[%s358] sm:$0xf]
        %v498 = vsel %vm409, %v407, 0.0
        %v499 = vsel %vm409, %v408, 0.0
        %v500 = vadd.f32 %v498, %v499
        %501 = vadd.xlane.f32.xlu0 %v500
        %v502 = vpop.xlane.xlu0 %501
        %v503 = vadd.f32 %v497, %v502
        %504 = vst.msk [vmem:[%s358] sm:$0xf] %vm487, %v503
        %v505 = vmul.f32 %v395, %v407
        %v506 = vmul.f32 %v396, %v408
        %v507 = vsel %vm409, %v505, 0.0
        %v508 = vrot.slane %v507, 4
        %v509 = vadd.f32 %v507, %v508
        %v510 = vrot.slane %v509, 2
        %v511 = vadd.f32 %v509, %v510
        %v512 = vrot.slane %v511, 1
        %v513 = vadd.f32 %v511, %v512
        %v514 = vsel %vm409, %v506, 0.0
        %v515 = vrot.slane %v514, 4
        %v516 = vadd.f32 %v514, %v515
        %v517 = vrot.slane %v516, 2
        %v518 = vadd.f32 %v516, %v517
        %v519 = vrot.slane %v518, 1
        %v520 = vadd.f32 %v518, %v519
        %v521 = vlog2.pop %v436
        %v522 = vmul.f32 %v521, 0.6931472
        %v523 = vlog2.pop %v443
        %v524 = vmul.f32 %v523, 0.6931472
        %v525 = vadd.f32 %v416, %v522
        %v526 = vadd.f32 %v423, %v524
        %v527 = vmul.f32 %v525, %v385
        %v528 = vmul.f32 %v526, %v386
        %v529 = vsub.f32 %v527, %v513
        %v530 = vsub.f32 %v528, %v520
        %v531 = vld [vmem:[#allocation7] sm:$0x1]
        %v532 = vadd.f32 %v529, %v530
        %533 = vadd.xlane.f32.xlu0 %v532
        %v534 = vpop.xlane.xlu0 %533
        %v535 = vadd.f32 %v531, %v534
        %vm536 = vcmask 0
        %537 = vst.msk [vmem:[#allocation7] sm:$0x1] %vm536, %v535
        %p538 = scmp.lt.s32.totalorder %s29, 0
        %s539 = scalar_select %p538, %s29, 0
        %s540 = smul.addr %s539, 4
        %s541 = scalar_lea.vmem %s2, %s540
        %p542 = scmp.lt.s32.totalorder %s29, 0
        %s543 = scalar_select %p542, %s29, 0
        %s544 = smul.addr %s543, 4
        %s545 = scalar_lea.vmem %s3, %s544
        %p546 = scmp.lt.s32.totalorder %s29, 0
        %s547 = scalar_select %p546, %s29, 0
        %s548 = smul.addr %s547, 4
        %s549 = scalar_lea.vmem %s4, %s548
        // Predicated region
        $region41: #{tpu_custom_call.1} parent=27 // pred_check
          %p550 = pneg %p129
        $region42: #{tpu_custom_call.1} parent=27 // pred_check_branch
          %552 = sbr.rel (%p550) target = $region44
        $region43: #{tpu_custom_call.1} parent=27 // pred_region
          _
        $region44: #{tpu_custom_call.1} parent=27 // pred_fallthru
          _
        // Predicated region
        $region45: #{tpu_custom_call.1} parent=27 // pred_check
          %p553 = pneg %p155
        $region46: #{tpu_custom_call.1} parent=27 // pred_check_branch
          %555 = sbr.rel (%p553) target = $region48
        $region47: #{tpu_custom_call.1} parent=27 // pred_region
          _
        $region48: #{tpu_custom_call.1} parent=27 // pred_fallthru
          _
        // Predicated region
        $region49: #{tpu_custom_call.1} parent=27 // pred_check
          %p556 = pneg %p181
        $region50: #{tpu_custom_call.1} parent=27 // pred_check_branch
          %558 = sbr.rel (%p556) target = $region52
        $region51: #{tpu_custom_call.1} parent=27 // pred_region
          _
        $region52: #{tpu_custom_call.1} parent=27 // pred_fallthru
          _
        // Predicated region
        $region53: #{tpu_custom_call.1} parent=27 // pred_check
          %p559 = pneg %p207
        $region54: #{tpu_custom_call.1} parent=27 // pred_check_branch
          %561 = sbr.rel (%p559) target = $region56
        $region55: #{tpu_custom_call.1} parent=27 // pred_region
          %563 = vsyncadd [#allocation4], 0
          %s564 = scalar_lea.hbm %s5, %s29
          %s566 = sshll.u32 [#allocation7], 4
          %s567 = int_to_ptr.vmem [resolvable:$true] %s566
          %s568 = sshll.u32 %s564, 4
          %s569 = int_to_ptr.hbm [resolvable:$true] %s568
          %571 = dma.vmem_to_hbm [thread:$0]  %s567, 16, %s569, [#allocation4]
        $region56: #{tpu_custom_call.1} parent=27 // pred_fallthru
          _
        // Predicated region
        $region57: #{tpu_custom_call.1} parent=27 // pred_check
          %p572 = pneg %p129
        $region58: #{tpu_custom_call.1} parent=27 // pred_check_branch
          %574 = sbr.rel (%p572) target = $region60
        $region59: #{tpu_custom_call.1} parent=27 // pred_region
          %p575 = scmp.lt.s32.totalorder %s29, 0
          %s576 = scalar_select %p575, %s29, 0
          %s577 = smul.addr %s576, 4
          %s578 = scalar_lea.vmem %s2, %s577
        $region60: #{tpu_custom_call.1} parent=27 // pred_fallthru
          _
        // Predicated region
        $region61: #{tpu_custom_call.1} parent=27 // pred_check
          %p579 = pneg %p155
        $region62: #{tpu_custom_call.1} parent=27 // pred_check_branch
          %581 = sbr.rel (%p579) target = $region64
        $region63: #{tpu_custom_call.1} parent=27 // pred_region
          %p582 = scmp.lt.s32.totalorder %s29, 0
          %s583 = scalar_select %p582, %s29, 0
          %s584 = smul.addr %s583, 4
          %s585 = scalar_lea.vmem %s3, %s584
        $region64: #{tpu_custom_call.1} parent=27 // pred_fallthru
          _
        // Predicated region
        $region65: #{tpu_custom_call.1} parent=27 // pred_check
          %p586 = pneg %p181
        $region66: #{tpu_custom_call.1} parent=27 // pred_check_branch
          %588 = sbr.rel (%p586) target = $region68
        $region67: #{tpu_custom_call.1} parent=27 // pred_region
          %p589 = scmp.lt.s32.totalorder %s29, 0
          %s590 = scalar_select %p589, %s29, 0
          %s591 = smul.addr %s590, 4
          %s592 = scalar_lea.vmem %s4, %s591
        $region68: #{tpu_custom_call.1} parent=27 // pred_fallthru
          _
        // Predicated region
        $region69: #{tpu_custom_call.1} parent=27 // pred_check
          %p593 = pneg %p207
        $region70: #{tpu_custom_call.1} parent=27 // pred_check_branch
          %595 = sbr.rel (%p593) target = $region72
        $region71: #{tpu_custom_call.1} parent=27 // pred_region
          %597 = dma.done [#allocation4], 16
        $region72: #{tpu_custom_call.1} parent=27 // pred_fallthru
          _
      $region28: #{tpu_custom_call.1} parent=5 // pred_fallthru
        _
      %p598 = scmp.le.s32.totalorder 2, %s19
      // Predicated region
      $region73: #{tpu_custom_call.1} parent=5 // pred_check
        %p599 = pneg %p598
      $region74: #{tpu_custom_call.1} parent=5 // pred_check_branch
        %601 = sbr.rel (%p599) target = $region76
      $region75: #{tpu_custom_call.1} parent=5 // pred_region
        %s602 = ssub.s32 %s19, 2
      $region76: #{tpu_custom_call.1} parent=5 // pred_fallthru
        _
    $region6: #{tpu_custom_call.1} parent=1 // loop_footer
      %s23 = sadd.s32 1, %s19
    $region7: #{tpu_custom_call.1} parent=1 // loop_footer_branch
      %18 = sbr.rel target = $region3
    $region8: #{tpu_custom_call.1} parent=1 // loop_exit
      _
    %603 = vsyncpa [#allocation3], 1
    %s604 = scalar_lea.sflag [#allocation3], 1
    %605 = vsyncpa %s604, 1
    %606 = vsyncpa [#allocation6], 1
    %s607 = scalar_lea.sflag [#allocation6], 1
    %608 = vsyncpa %s607, 1
    %609 = vsyncpa [#allocation4], 1
    %s610 = scalar_lea.sflag [#allocation4], 1
    %611 = vsyncpa %s610, 1

</llo_original>
